<compile_context>
chip_gen: v7x
topology: tpu7x:2x2x1
jax: 0.10.0
libtpu: 0.0.40
codegen_flags: <defaults>
</compile_context>

<pallas_src>
import functools

import jax
import jax.numpy as jnp
from jax import lax
from jax.experimental import pallas as pl
from jax.experimental.pallas import tpu as pltpu

COLOR_HIDDEN = 16      # nn.Linear(3, 16) in the color branch
TB_CAP = 2048          # batch-tile cap (rows); blocks stay << 32 MiB scoped VMEM


def _cdiv(a, b):
    return -(-a // b)


def _round_up(v, m):
    return _cdiv(v, m) * m


def make_action_encoder_kernel(hidden_layers, hidden_dim,
                               color_hidden=COLOR_HIDDEN,
                               compute_dtype=jnp.float32):
    """Kernel body for a fixed (static) number of hidden blocks."""
    H, C = hidden_dim, color_hidden
    del C  # color width only shows up via the weight shapes

    def kernel(x_ref, w0_ref, b0_ref, wc1_ref, bc1_ref,
               w_hid_ref, b_hid_ref, w_lt_ref, w_lc_ref, b_last_ref, out_ref):
        def leaky(v):
            return jnp.where(v > 0, v, 0.2 * v)

        def cast(v):  # matmul-operand dtype (f32 or bf16); accumulation stays f32
            return v.astype(compute_dtype)

        x = x_ref[...]                                            # [TB, A]

        # First layers: trunk Linear(A-3, H) and color Linear(3, 16), each as a
        # zero-padded [A, *] weight so both read the whole x block -> no lane
        # slicing of x or of a fused result inside the kernel.
        h = (jnp.dot(x, w0_ref[...], preferred_element_type=jnp.float32)
             + b0_ref[...])                                       # [TB, H]
        c = leaky(jnp.dot(x, wc1_ref[...], preferred_element_type=jnp.float32)
                  + bc1_ref[...])                                 # [TB, 16]

        # Hidden trunk blocks: Linear + folded BatchNorm + LeakyReLU(0.2).
        # Dropout(0.3) is the identity in eval mode.
        # TODO(synk): training-mode Dropout / batch-stat BatchNorm not implemented.
        if hidden_layers <= 8:
            for l in range(hidden_layers):
                h = leaky(jnp.dot(cast(h), w_hid_ref[l],
                                  preferred_element_type=jnp.float32)
                          + b_hid_ref[l])
        else:
            def body(l, hv):
                return leaky(jnp.dot(cast(hv), w_hid_ref[l],
                                     preferred_element_type=jnp.float32)
                             + b_hid_ref[l])
            h = lax.fori_loop(0, hidden_layers, body, h)

        # Last layers: trunk Linear(H, latent-3) and color Linear(16, 3) as two
        # output-column-padded dots summed -> no concat, one full-width store
        # that already matches torch.cat((trunk, color), 1) ordering.
        out = (jnp.dot(cast(h), w_lt_ref[...], preferred_element_type=jnp.float32)
               + jnp.dot(cast(c), w_lc_ref[...], preferred_element_type=jnp.float32)
               + b_last_ref[...])                                 # [TB, latent]
        out_ref[...] = out.astype(out_ref.dtype)

    return kernel


def init_params(key, action_dim, latent_dim, hidden_dim, hidden_layers):
    """Deterministic synthetic parameters.  Weights kept in PyTorch [out,in]."""

    def lin(k, out_f, in_f):
        k1, k2 = jax.random.split(k)
        w = jax.random.normal(k1, (out_f, in_f), jnp.float32) * 0.1
        b = jax.random.normal(k2, (1, out_f), jnp.float32) * 0.1
        return w, b

    keys = jax.random.split(key, hidden_layers + 4)
    params = []
    # first Linear(action_dim-3, hidden_dim)
    params += list(lin(keys[0], hidden_dim, action_dim - 3))
    # hidden blocks: Linear + BatchNorm1d params (running stats)
    for i in range(hidden_layers):
        w, b = lin(keys[1 + i], hidden_dim, hidden_dim)
        gamma = jnp.ones((1, hidden_dim), jnp.float32)
        beta = jnp.zeros((1, hidden_dim), jnp.float32)
        r_mean = jnp.zeros((1, hidden_dim), jnp.float32)
        r_var = jnp.ones((1, hidden_dim), jnp.float32)
        params += [w, b, gamma, beta, r_mean, r_var]
    # final Linear(hidden_dim, latent_dim-3)
    params += list(lin(keys[hidden_layers + 1], latent_dim - 3, hidden_dim))
    # color branch: Linear(3,16), Linear(16,3)
    params += list(lin(keys[hidden_layers + 2], 16, 3))
    params += list(lin(keys[hidden_layers + 3], 3, 16))
    return params


def pack_params(params, action_dim, latent_dim, hidden_dim, hidden_layers,
                eps=1e-5, color_hidden=COLOR_HIDDEN, compute_dtype=jnp.float32):
    """Fold BN into Linears and pack into the kernel's weight layout ([in,out])."""
    A, H, C = action_dim, hidden_dim, color_hidden
    idx = 0
    w0, b0 = params[idx], params[idx + 1]; idx += 2          # [H, A-3], [1, H]
    hidden = []
    for _ in range(hidden_layers):
        w, b, g, bt, m, v = params[idx:idx + 6]; idx += 6
        scale = g * jax.lax.rsqrt(v + eps)                   # [1, H]
        w_fold = w * scale.T                                 # fold per out-channel
        b_fold = (b - m) * scale + bt                        # [1, H]
        hidden.append((w_fold, b_fold))
    wf, bfin = params[idx], params[idx + 1]; idx += 2        # [lat-3, H]
    wc1, bc1 = params[idx], params[idx + 1]; idx += 2        # [16, 3]
    wc2, bc2 = params[idx], params[idx + 1]; idx += 2        # [3, 16]

    # First trunk layer on the whole x: [A, H].  Trunk uses x columns
    # [0:6, 9:A]; the color rows 6:9 are zeroed.
    w0_t = w0.T                                              # [A-3, H]
    w0_p = jnp.zeros((A, H), jnp.float32)
    w0_p = w0_p.at[0:6, :].set(w0_t[0:6])
    w0_p = w0_p.at[9:A, :].set(w0_t[6:])
    # First color layer on the whole x: [A, C] with only rows 6:9 non-zero.
    wc1_p = jnp.zeros((A, C), jnp.float32).at[6:9, :].set(wc1.T)

    # Stacked (BN-folded) hidden layers, transposed to [in, out].
    w_hid = jnp.stack([wl.T for (wl, _) in hidden], axis=0)     # [L, H, H]
    b_hid = jnp.stack([bl for (_, bl) in hidden], axis=0)       # [L, 1, H]

    # Last layers as output-column-padded [*, latent] weights (summed in-kernel).
    w_lt = jnp.zeros((H, latent_dim), jnp.float32).at[:, :latent_dim - 3].set(wf.T)
    w_lc = jnp.zeros((C, latent_dim), jnp.float32).at[:, latent_dim - 3:].set(wc2.T)
    b_last = jnp.concatenate([bfin, bc2], axis=1)            # [1, latent]

    cdt = compute_dtype  # matmul operands; biases stay f32 (added post-accum)
    return (w0_p.astype(cdt), b0, wc1_p.astype(cdt), bc1,
            w_hid.astype(cdt), b_hid, w_lt.astype(cdt), w_lc.astype(cdt), b_last)


@functools.partial(jax.jit, static_argnames=(
    "action_dim", "latent_dim", "hidden_dim", "hidden_layers", "compute_dtype"))
def action_encoder_forward(x, params_tuple, *, action_dim, latent_dim,
                           hidden_dim, hidden_layers,
                           compute_dtype=jnp.float32):
    B = x.shape[0]
    A, H, C = action_dim, hidden_dim, COLOR_HIDDEN
    assert x.shape[1] == A
    assert A >= 9 and latent_dim > 3 and hidden_layers >= 1

    (w0_p, b0, wc1_p, bc1, w_hid, b_hid, w_lt, w_lc, b_last) = pack_params(
        list(params_tuple), A, latent_dim, H, hidden_layers,
        compute_dtype=compute_dtype)

    # ---- Batch tiling -------------------------------------------------------
    # Large tiles (cap 2048 rows) cut per-step overhead; >=2 grid steps when
    # B >= 16 so v7x's two TensorCores both get work; awkward B is padded up to
    # n_steps*TB (zero rows) rather than shrinking the tile.
    if B >= 16:
        n_steps = max(2, _cdiv(B, TB_CAP))
    else:
        n_steps = 1
    TB = _round_up(_cdiv(B, n_steps), 8)
    B_pad = n_steps * TB

    x_c = x.astype(compute_dtype)
    if B_pad != B:
        x_c = jnp.pad(x_c, ((0, B_pad - B), (0, 0)))

    kernel = make_action_encoder_kernel(hidden_layers, H, C, compute_dtype)

    out = pl.pallas_call(
        kernel,
        out_shape=jax.ShapeDtypeStruct((B_pad, latent_dim), jnp.float32),
        grid_spec=pltpu.PrefetchScalarGridSpec(
            num_scalar_prefetch=0,
            grid=(n_steps,),
            in_specs=[
                pl.BlockSpec((TB, A), lambda i: (i, 0)),                    # x
                pl.BlockSpec((A, H), lambda i: (0, 0)),                     # w0
                pl.BlockSpec((1, H), lambda i: (0, 0)),                     # b0
                pl.BlockSpec((A, C), lambda i: (0, 0)),                     # wc1
                pl.BlockSpec((1, C), lambda i: (0, 0)),                     # bc1
                pl.BlockSpec((hidden_layers, H, H), lambda i: (0, 0, 0)),   # w_hid
                pl.BlockSpec((hidden_layers, 1, H), lambda i: (0, 0, 0)),   # b_hid
                pl.BlockSpec((H, latent_dim), lambda i: (0, 0)),            # w_last trunk
                pl.BlockSpec((C, latent_dim), lambda i: (0, 0)),            # w_last color
                pl.BlockSpec((1, latent_dim), lambda i: (0, 0)),            # b_last
            ],
            out_specs=pl.BlockSpec((TB, latent_dim), lambda i: (i, 0)),
        ),
        compiler_params=pltpu.CompilerParams(
            dimension_semantics=("parallel",),
            vmem_limit_bytes=32 * 1024 * 1024),
    )(x_c, w0_p, b0, wc1_p, bc1, w_hid, b_hid, w_lt, w_lc, b_last)

    return out[:B] if B_pad != B else out


def reference_forward(x, params, hidden_layers):
    """Pure-JAX eval-mode reference (un-folded BN) for correctness checking."""
    def leaky(h):
        return jnp.where(h > 0, h, 0.2 * h)

    color = x[:, 6:9]
    h = jnp.concatenate([x[:, :6], x[:, 9:]], axis=1)
    idx = 0
    w, b = params[idx], params[idx + 1]; idx += 2
    h = h @ w.T + b
    for _ in range(hidden_layers):
        w, b, g, bt, m, v = params[idx:idx + 6]; idx += 6
        h = h @ w.T + b
        h = (h - m) / jnp.sqrt(v + 1e-5) * g + bt
        h = leaky(h)
    w, b = params[idx], params[idx + 1]; idx += 2
    h = h @ w.T + b
    wc1, bc1 = params[idx], params[idx + 1]; idx += 2
    wc2, bc2 = params[idx], params[idx + 1]; idx += 2
    c = leaky(color @ wc1.T + bc1)
    c = c @ wc2.T + bc2
    return jnp.concatenate([h, c], axis=1)


if __name__ == "__main__":
    action_dim, latent_dim, hidden_dim, hidden_layers = 12, 11, 32, 2
    dims = dict(action_dim=action_dim, latent_dim=latent_dim,
                hidden_dim=hidden_dim, hidden_layers=hidden_layers)

    key = jax.random.PRNGKey(0)
    k_x, k_p, k_x2, k_p2 = jax.random.split(key, 4)
    params = init_params(k_p, action_dim, latent_dim, hidden_dim, hidden_layers)

    # 1) Small batch (single tile, grid=(1,)).
    x = jax.random.normal(k_x, (8, action_dim), jnp.float32)
    out = jax.block_until_ready(action_encoder_forward(
        x, tuple(params), compute_dtype=jnp.float32, **dims))
    ref = jax.block_until_ready(reference_forward(x, params, hidden_layers))
    assert out.shape == (8, latent_dim)
    assert jnp.allclose(out, ref, atol=2e-3, rtol=2e-3), "mismatch (B=8)"

    # 2) Awkward batch: padded to 2 grid steps (v7x megacore sizing rule).
    x2 = jax.random.normal(k_x2, (520, action_dim), jnp.float32)
    out2 = jax.block_until_ready(action_encoder_forward(
        x2, tuple(params), compute_dtype=jnp.float32, **dims))
    ref2 = jax.block_until_ready(reference_forward(x2, params, hidden_layers))
    assert out2.shape == (520, latent_dim)
    assert jnp.allclose(out2, ref2, atol=2e-3, rtol=2e-3), "mismatch (B=520)"

    # 3) bf16 matmul-operand path (f32 accumulation) — optional MXU-rate win.
    out3 = jax.block_until_ready(action_encoder_forward(
        x2, tuple(params), compute_dtype=jnp.bfloat16, **dims))
    assert jnp.allclose(out3, ref2, atol=5e-2, rtol=5e-2), "mismatch (bf16)"

    # 4) Deep trunk: exercises the lax.fori_loop hidden-layer path (>8 layers).
    deep_layers = 9
    params_deep = init_params(k_p2, action_dim, latent_dim, hidden_dim, deep_layers)
    out4 = jax.block_until_ready(action_encoder_forward(
        x, tuple(params_deep), action_dim=action_dim, latent_dim=latent_dim,
        hidden_dim=hidden_dim, hidden_layers=deep_layers,
        compute_dtype=jnp.float32))
    ref4 = jax.block_until_ready(reference_forward(x, params_deep, deep_layers))
    assert jnp.allclose(out4, ref4, atol=2e-3, rtol=2e-3), "mismatch (deep)"

    print("KERNEL_OK")
</pallas_src>

<mosaic_0001>
module attributes {stable_mosaic.version = 11 : i64} {
  func.func @kernel(%arg0: i32, %arg1: memref<8x12xf32, #tpu.memory_space<vmem>>, %arg2: memref<12x32xf32, #tpu.memory_space<vmem>>, %arg3: memref<1x32xf32, #tpu.memory_space<vmem>>, %arg4: memref<12x16xf32, #tpu.memory_space<vmem>>, %arg5: memref<1x16xf32, #tpu.memory_space<vmem>>, %arg6: memref<2x32x32xf32, #tpu.memory_space<vmem>>, %arg7: memref<2x1x32xf32, #tpu.memory_space<vmem>>, %arg8: memref<32x11xf32, #tpu.memory_space<vmem>>, %arg9: memref<16x11xf32, #tpu.memory_space<vmem>>, %arg10: memref<1x11xf32, #tpu.memory_space<vmem>>, %arg11: memref<8x11xf32, #tpu.memory_space<vmem>>) attributes {dimension_semantics = [#tpu.dimension_semantics<parallel>], iteration_bounds = array<i64: 1>, scalar_prefetch = 0 : i64, scratch_operands = 0 : i64, tpu.core_type = #tpu.core_type<tc>, window_params = [{transform_indices = @transform_0, window_bounds = array<i64: 8, 12>}, {pipeline_mode = #tpu.pipeline_mode<synchronous>, transform_indices = @transform_1, window_bounds = array<i64: 12, 32>}, {pipeline_mode = #tpu.pipeline_mode<synchronous>, transform_indices = @transform_2, window_bounds = array<i64: 1, 32>}, {pipeline_mode = #tpu.pipeline_mode<synchronous>, transform_indices = @transform_3, window_bounds = array<i64: 12, 16>}, {pipeline_mode = #tpu.pipeline_mode<synchronous>, transform_indices = @transform_4, window_bounds = array<i64: 1, 16>}, {pipeline_mode = #tpu.pipeline_mode<synchronous>, transform_indices = @transform_5, window_bounds = array<i64: 2, 32, 32>}, {pipeline_mode = #tpu.pipeline_mode<synchronous>, transform_indices = @transform_6, window_bounds = array<i64: 2, 1, 32>}, {pipeline_mode = #tpu.pipeline_mode<synchronous>, transform_indices = @transform_7, window_bounds = array<i64: 32, 11>}, {pipeline_mode = #tpu.pipeline_mode<synchronous>, transform_indices = @transform_8, window_bounds = array<i64: 16, 11>}, {pipeline_mode = #tpu.pipeline_mode<synchronous>, transform_indices = @transform_9, window_bounds = array<i64: 1, 11>}, {transform_indices = @transform_10, window_bounds = array<i64: 8, 11>}]} {
    %c0 = arith.constant 0 : index
    %c0_0 = arith.constant 0 : index
    %0 = vector.load %arg1[%c0, %c0_0] : memref<8x12xf32, #tpu.memory_space<vmem>>, vector<8x12xf32>
    %c0_1 = arith.constant 0 : index
    %c0_2 = arith.constant 0 : index
    %1 = vector.load %arg2[%c0_1, %c0_2] : memref<12x32xf32, #tpu.memory_space<vmem>>, vector<12x32xf32>
    %cst = arith.constant dense<0.000000e+00> : vector<8x32xf32>
    %2 = tpu.matmul %0, %1, %cst {dimension_numbers = #tpu.dot_dimension_numbers<[1], [0], [0], [1], [0, 0, 1, 1], [], []>} : vector<8x12xf32>, vector<12x32xf32>, vector<8x32xf32> -> vector<8x32xf32>
    %c0_3 = arith.constant 0 : index
    %c0_4 = arith.constant 0 : index
    %3 = vector.load %arg3[%c0_3, %c0_4] : memref<1x32xf32, #tpu.memory_space<vmem>>, vector<1x32xf32>
    %4 = vector.broadcast %3 : vector<1x32xf32> to vector<8x32xf32>
    %5 = arith.addf %2, %4 : vector<8x32xf32>
    %c0_5 = arith.constant 0 : index
    %c0_6 = arith.constant 0 : index
    %6 = vector.load %arg4[%c0_5, %c0_6] : memref<12x16xf32, #tpu.memory_space<vmem>>, vector<12x16xf32>
    %cst_7 = arith.constant dense<0.000000e+00> : vector<8x16xf32>
    %7 = tpu.matmul %0, %6, %cst_7 {dimension_numbers = #tpu.dot_dimension_numbers<[1], [0], [0], [1], [0, 0, 1, 1], [], []>} : vector<8x12xf32>, vector<12x16xf32>, vector<8x16xf32> -> vector<8x16xf32>
    %c0_8 = arith.constant 0 : index
    %c0_9 = arith.constant 0 : index
    %8 = vector.load %arg5[%c0_8, %c0_9] : memref<1x16xf32, #tpu.memory_space<vmem>>, vector<1x16xf32>
    %9 = vector.broadcast %8 : vector<1x16xf32> to vector<8x16xf32>
    %10 = arith.addf %7, %9 : vector<8x16xf32>
    %cst_10 = arith.constant 0.000000e+00 : f32
    %11 = vector.broadcast %cst_10 : f32 to vector<8x16xf32>
    %12 = arith.cmpf ogt, %10, %11 : vector<8x16xf32>
    %cst_11 = arith.constant 2.000000e-01 : f32
    %13 = vector.broadcast %cst_11 : f32 to vector<8x16xf32>
    %14 = arith.mulf %13, %10 : vector<8x16xf32>
    %15 = arith.select %12, %10, %14 : vector<8x16xi1>, vector<8x16xf32>
    %c0_12 = arith.constant 0 : index
    %c0_13 = arith.constant 0 : index
    %c0_14 = arith.constant 0 : index
    %16 = vector.load %arg6[%c0_12, %c0_13, %c0_14] : memref<2x32x32xf32, #tpu.memory_space<vmem>>, vector<1x32x32xf32>
    %17 = vector.shape_cast %16 : vector<1x32x32xf32> to vector<32x32xf32>
    %cst_15 = arith.constant dense<0.000000e+00> : vector<8x32xf32>
    %18 = tpu.matmul %5, %17, %cst_15 {dimension_numbers = #tpu.dot_dimension_numbers<[1], [0], [0], [1], [0, 0, 1, 1], [], []>} : vector<8x32xf32>, vector<32x32xf32>, vector<8x32xf32> -> vector<8x32xf32>
    %c0_16 = arith.constant 0 : index
    %c0_17 = arith.constant 0 : index
    %c0_18 = arith.constant 0 : index
    %19 = vector.load %arg7[%c0_16, %c0_17, %c0_18] : memref<2x1x32xf32, #tpu.memory_space<vmem>>, vector<1x1x32xf32>
    %20 = vector.shape_cast %19 : vector<1x1x32xf32> to vector<1x32xf32>
    %21 = vector.broadcast %20 : vector<1x32xf32> to vector<8x32xf32>
    %22 = arith.addf %18, %21 : vector<8x32xf32>
    %cst_19 = arith.constant 0.000000e+00 : f32
    %23 = vector.broadcast %cst_19 : f32 to vector<8x32xf32>
    %24 = arith.cmpf ogt, %22, %23 : vector<8x32xf32>
    %cst_20 = arith.constant 2.000000e-01 : f32
    %25 = vector.broadcast %cst_20 : f32 to vector<8x32xf32>
    %26 = arith.mulf %25, %22 : vector<8x32xf32>
    %27 = arith.select %24, %22, %26 : vector<8x32xi1>, vector<8x32xf32>
    %c1 = arith.constant 1 : index
    %c0_21 = arith.constant 0 : index
    %c0_22 = arith.constant 0 : index
    %28 = vector.load %arg6[%c1, %c0_21, %c0_22] : memref<2x32x32xf32, #tpu.memory_space<vmem>>, vector<1x32x32xf32>
    %29 = vector.shape_cast %28 : vector<1x32x32xf32> to vector<32x32xf32>
    %cst_23 = arith.constant dense<0.000000e+00> : vector<8x32xf32>
    %30 = tpu.matmul %27, %29, %cst_23 {dimension_numbers = #tpu.dot_dimension_numbers<[1], [0], [0], [1], [0, 0, 1, 1], [], []>} : vector<8x32xf32>, vector<32x32xf32>, vector<8x32xf32> -> vector<8x32xf32>
    %c1_24 = arith.constant 1 : index
    %c0_25 = arith.constant 0 : index
    %c0_26 = arith.constant 0 : index
    %31 = vector.load %arg7[%c1_24, %c0_25, %c0_26] : memref<2x1x32xf32, #tpu.memory_space<vmem>>, vector<1x1x32xf32>
    %32 = vector.shape_cast %31 : vector<1x1x32xf32> to vector<1x32xf32>
    %33 = vector.broadcast %32 : vector<1x32xf32> to vector<8x32xf32>
    %34 = arith.addf %30, %33 : vector<8x32xf32>
    %cst_27 = arith.constant 0.000000e+00 : f32
    %35 = vector.broadcast %cst_27 : f32 to vector<8x32xf32>
    %36 = arith.cmpf ogt, %34, %35 : vector<8x32xf32>
    %cst_28 = arith.constant 2.000000e-01 : f32
    %37 = vector.broadcast %cst_28 : f32 to vector<8x32xf32>
    %38 = arith.mulf %37, %34 : vector<8x32xf32>
    %39 = arith.select %36, %34, %38 : vector<8x32xi1>, vector<8x32xf32>
    %c0_29 = arith.constant 0 : index
    %c0_30 = arith.constant 0 : index
    %40 = vector.load %arg8[%c0_29, %c0_30] : memref<32x11xf32, #tpu.memory_space<vmem>>, vector<32x11xf32>
    %cst_31 = arith.constant dense<0.000000e+00> : vector<8x11xf32>
    %41 = tpu.matmul %39, %40, %cst_31 {dimension_numbers = #tpu.dot_dimension_numbers<[1], [0], [0], [1], [0, 0, 1, 1], [], []>} : vector<8x32xf32>, vector<32x11xf32>, vector<8x11xf32> -> vector<8x11xf32>
    %c0_32 = arith.constant 0 : index
    %c0_33 = arith.constant 0 : index
    %42 = vector.load %arg9[%c0_32, %c0_33] : memref<16x11xf32, #tpu.memory_space<vmem>>, vector<16x11xf32>
    %cst_34 = arith.constant dense<0.000000e+00> : vector<8x11xf32>
    %43 = tpu.matmul %15, %42, %cst_34 {dimension_numbers = #tpu.dot_dimension_numbers<[1], [0], [0], [1], [0, 0, 1, 1], [], []>} : vector<8x16xf32>, vector<16x11xf32>, vector<8x11xf32> -> vector<8x11xf32>
    %44 = arith.addf %41, %43 : vector<8x11xf32>
    %c0_35 = arith.constant 0 : index
    %c0_36 = arith.constant 0 : index
    %45 = vector.load %arg10[%c0_35, %c0_36] : memref<1x11xf32, #tpu.memory_space<vmem>>, vector<1x11xf32>
    %46 = vector.broadcast %45 : vector<1x11xf32> to vector<8x11xf32>
    %47 = arith.addf %44, %46 : vector<8x11xf32>
    %c0_37 = arith.constant 0 : index
    %c0_38 = arith.constant 0 : index
    %48 = vector.load %arg11[%c0_37, %c0_38] : memref<8x11xf32, #tpu.memory_space<vmem>>, vector<8x11xf32>
    tpu.vector_store %arg11[%c0_37, %c0_38], %47 {strides = array<i32>} : memref<8x11xf32, #tpu.memory_space<vmem>>, vector<8x11xf32>,
    return
  }
  func.func @transform_0(%arg0: i32) -> (i32, i32) {
    %c0_i32 = arith.constant 0 : i32
    %c0_i32_0 = arith.constant 0 : i32
    return %arg0, %c0_i32 : i32, i32
  }
  func.func @transform_1(%arg0: i32) -> (i32, i32) {
    %c0_i32 = arith.constant 0 : i32
    %c0_i32_0 = arith.constant 0 : i32
    %c0_i32_1 = arith.constant 0 : i32
    return %c0_i32, %c0_i32_0 : i32, i32
  }
  func.func @transform_2(%arg0: i32) -> (i32, i32) {
    %c0_i32 = arith.constant 0 : i32
    %c0_i32_0 = arith.constant 0 : i32
    %c0_i32_1 = arith.constant 0 : i32
    return %c0_i32, %c0_i32_0 : i32, i32
  }
  func.func @transform_3(%arg0: i32) -> (i32, i32) {
    %c0_i32 = arith.constant 0 : i32
    %c0_i32_0 = arith.constant 0 : i32
    %c0_i32_1 = arith.constant 0 : i32
    return %c0_i32, %c0_i32_0 : i32, i32
  }
  func.func @transform_4(%arg0: i32) -> (i32, i32) {
    %c0_i32 = arith.constant 0 : i32
    %c0_i32_0 = arith.constant 0 : i32
    %c0_i32_1 = arith.constant 0 : i32
    return %c0_i32, %c0_i32_0 : i32, i32
  }
  func.func @transform_5(%arg0: i32) -> (i32, i32, i32) {
    %c0_i32 = arith.constant 0 : i32
    %c0_i32_0 = arith.constant 0 : i32
    %c0_i32_1 = arith.constant 0 : i32
    %c0_i32_2 = arith.constant 0 : i32
    return %c0_i32, %c0_i32_0, %c0_i32_1 : i32, i32, i32
  }
  func.func @transform_6(%arg0: i32) -> (i32, i32, i32) {
    %c0_i32 = arith.constant 0 : i32
    %c0_i32_0 = arith.constant 0 : i32
    %c0_i32_1 = arith.constant 0 : i32
    %c0_i32_2 = arith.constant 0 : i32
    return %c0_i32, %c0_i32_0, %c0_i32_1 : i32, i32, i32
  }
  func.func @transform_7(%arg0: i32) -> (i32, i32) {
    %c0_i32 = arith.constant 0 : i32
    %c0_i32_0 = arith.constant 0 : i32
    %c0_i32_1 = arith.constant 0 : i32
    return %c0_i32, %c0_i32_0 : i32, i32
  }
  func.func @transform_8(%arg0: i32) -> (i32, i32) {
    %c0_i32 = arith.constant 0 : i32
    %c0_i32_0 = arith.constant 0 : i32
    %c0_i32_1 = arith.constant 0 : i32
    return %c0_i32, %c0_i32_0 : i32, i32
  }
  func.func @transform_9(%arg0: i32) -> (i32, i32) {
    %c0_i32 = arith.constant 0 : i32
    %c0_i32_0 = arith.constant 0 : i32
    %c0_i32_1 = arith.constant 0 : i32
    return %c0_i32, %c0_i32_0 : i32, i32
  }
  func.func @transform_10(%arg0: i32) -> (i32, i32) {
    %c0_i32 = arith.constant 0 : i32
    %c0_i32_0 = arith.constant 0 : i32
    return %arg0, %c0_i32 : i32, i32
  }
}

</mosaic_0001>

<llo_original>
// kernel: action_encoder_forward.1
$region0: #{action_encoder_forward.1}
  #allocation0 [shape = 'u32[]', space=smem, size = 0x4, offset = 0x4, fixed_abs, tag = 'smem constant byte address 0x4 - core index']
  #allocation1 [shape = 'u32[144,128]{1,0:T(1,128)}', space=vmem, size = 0x12000, scoped, tag = 'internal scratch']
  %s0 = inlined_call_operand.vmem [shape: f32[8,12], index: 0, kind: input, shape index: {}]
  %s1 = inlined_call_operand.vmem [shape: f32[12,32], index: 1, kind: input, shape index: {}]
  %s2 = inlined_call_operand.vmem [shape: f32[1,32], index: 2, kind: input, shape index: {}]
  %s3 = inlined_call_operand.vmem [shape: f32[12,16], index: 3, kind: input, shape index: {}]
  %s4 = inlined_call_operand.vmem [shape: f32[1,16], index: 4, kind: input, shape index: {}]
  %s5 = inlined_call_operand.vmem [shape: f32[2,32,32], index: 5, kind: input, shape index: {}]
  %s6 = inlined_call_operand.vmem [shape: f32[2,1,32], index: 6, kind: input, shape index: {}]
  %s7 = inlined_call_operand.vmem [shape: f32[32,11], index: 7, kind: input, shape index: {}]
  %s8 = inlined_call_operand.vmem [shape: f32[16,11], index: 8, kind: input, shape index: {}]
  %s9 = inlined_call_operand.vmem [shape: f32[1,11], index: 9, kind: input, shape index: {}]
  %s10 = inlined_call_operand.hbm [shape: f32[8,11], index: 10, kind: output, shape index: {}]
  %s11 = sld [smem:[#allocation0]]
  $region50: #{action_encoder_forward.1} parent=0
    _
  %s13 = ssub.s32 1, %s11
  %s14 = scalar_select 0, %s13, %s11
  $region1: #{action_encoder_forward.1} parent=0
    #allocation2 [shape = 'u8[4096]{0}', space=vmem, size = 0x1000, scoped, tag = 'output window, operand 0, single buffered']
    #allocation3 [shape = 's32[1]{0}', space=sflag, size = 0x4, scoped, tag = 'scoped memory for action_encoder_forward.1']
    %15 = vsyncpa [#allocation3], 0
    // Predicated region
    $region2: #{action_encoder_forward.1} parent=1 // pred_check
      _
    $region3: #{action_encoder_forward.1} parent=1 // pred_check_branch
      %17 = sbr.rel (0) target = $region5
    $region4: #{action_encoder_forward.1} parent=1 // pred_region
      _
    $region5: #{action_encoder_forward.1} parent=1 // pred_fallthru
      _
    // Predicated region
    $region6: #{action_encoder_forward.1} parent=1 // pred_check
      _
    $region7: #{action_encoder_forward.1} parent=1 // pred_check_branch
      %19 = sbr.rel (0) target = $region9
    $region8: #{action_encoder_forward.1} parent=1 // pred_region
      _
    $region9: #{action_encoder_forward.1} parent=1 // pred_fallthru
      _
    // Predicated region
    $region10: #{action_encoder_forward.1} parent=1 // pred_check
      _
    $region11: #{action_encoder_forward.1} parent=1 // pred_check_branch
      %21 = sbr.rel (0) target = $region13
    $region12: #{action_encoder_forward.1} parent=1 // pred_region
      _
    $region13: #{action_encoder_forward.1} parent=1 // pred_fallthru
      _
    // Predicated region
    $region14: #{action_encoder_forward.1} parent=1 // pred_check
      _
    $region15: #{action_encoder_forward.1} parent=1 // pred_check_branch
      %23 = sbr.rel (0) target = $region17
    $region16: #{action_encoder_forward.1} parent=1 // pred_region
      _
    $region17: #{action_encoder_forward.1} parent=1 // pred_fallthru
      _
    // Predicated region
    $region18: #{action_encoder_forward.1} parent=1 // pred_check
      _
    $region19: #{action_encoder_forward.1} parent=1 // pred_check_branch
      %25 = sbr.rel (0) target = $region21
    $region20: #{action_encoder_forward.1} parent=1 // pred_region
      _
    $region21: #{action_encoder_forward.1} parent=1 // pred_fallthru
      _
    // Predicated region
    $region22: #{action_encoder_forward.1} parent=1 // pred_check
      _
    $region23: #{action_encoder_forward.1} parent=1 // pred_check_branch
      %27 = sbr.rel (0) target = $region25
    $region24: #{action_encoder_forward.1} parent=1 // pred_region
      _
    $region25: #{action_encoder_forward.1} parent=1 // pred_fallthru
      _
    // Predicated region
    $region26: #{action_encoder_forward.1} parent=1 // pred_check
      _
    $region27: #{action_encoder_forward.1} parent=1 // pred_check_branch
      %29 = sbr.rel (0) target = $region29
    $region28: #{action_encoder_forward.1} parent=1 // pred_region
      _
    $region29: #{action_encoder_forward.1} parent=1 // pred_fallthru
      _
    // Predicated region
    $region30: #{action_encoder_forward.1} parent=1 // pred_check
      _
    $region31: #{action_encoder_forward.1} parent=1 // pred_check_branch
      %31 = sbr.rel (0) target = $region33
    $region32: #{action_encoder_forward.1} parent=1 // pred_region
      _
    $region33: #{action_encoder_forward.1} parent=1 // pred_fallthru
      _
    // Predicated region
    $region34: #{action_encoder_forward.1} parent=1 // pred_check
      _
    $region35: #{action_encoder_forward.1} parent=1 // pred_check_branch
      %33 = sbr.rel (0) target = $region37
    $region36: #{action_encoder_forward.1} parent=1 // pred_region
      _
    $region37: #{action_encoder_forward.1} parent=1 // pred_fallthru
      _
    // Predicated region
    $region38: #{action_encoder_forward.1} parent=1 // pred_check
      _
    $region39: #{action_encoder_forward.1} parent=1 // pred_check_branch
      %35 = sbr.rel (0) target = $region41
    $region40: #{action_encoder_forward.1} parent=1 // pred_region
      _
    $region41: #{action_encoder_forward.1} parent=1 // pred_fallthru
      _
    %v36 = vld [vmem:[%s0] sm:$0xff]
    %v37 = vld [vmem:[%s1] sm:$0xff]
    %v38 = vld [vmem:[%s1 + $0x8] sm:$0xf]
    %v39 = vld [vmem:[%s2] sm:$0x1]
    %v41 = vlaneseq
    %v42 = vshrl.u32 %v41, 7
    %v43 = vsub.s32 0, %v42
    %v44 = vrot.slane %v39, %v43
    %vm46 = vcmask 97280
    %v48 = vsel %vm46, %v36, 0
    %vm50 = vcmask 1043456
    %v52 = vsel %vm50, %v38, 0
    %54 = vmatprep.subr.mxu0 0.0
    %55 = vmatpush1.msra.mxu0 %v37
    %56 = vmatprep.subr.mxu0 0.0
    %57 = vmatpush1.msra.mxu0 %v52
    %58 = vmatprep.subr.mxu0 0.0
    %59 = vmatpush1.msra.mxu0 0.0
    %60 = vmatprep.subr.mxu0 0.0
    %61 = vmatpush1.msra.mxu0 0.0
    %62 = vmatprep.subr.mxu0 0.0
    %63 = vmatpush1.msra.mxu0 0.0
    %64 = vmatprep.subr.mxu0 0.0
    %65 = vmatpush1.msra.mxu0 0.0
    %66 = vmatprep.subr.mxu0 0.0
    %67 = vmatpush1.msra.mxu0 0.0
    %68 = vmatprep.subr.mxu0 0.0
    %69 = vmatpush1.msra.mxu0 0.0
    %70 = vmatprep.subr.mxu0 0.0
    %71 = vmatpush1.msra.mxu0 0.0
    %72 = vmatprep.subr.mxu0 0.0
    %73 = vmatpush1.msra.mxu0 0.0
    %74 = vmatprep.subr.mxu0 0.0
    %75 = vmatpush1.msra.mxu0 0.0
    %76 = vmatprep.subr.mxu0 0.0
    %77 = vmatpush1.msra.mxu0 0.0
    %78 = vmatprep.subr.mxu0 0.0
    %79 = vmatpush1.msra.mxu0 0.0
    %80 = vmatprep.subr.mxu0 0.0
    %81 = vmatpush1.msra.mxu0 0.0
    %82 = vmatprep.subr.mxu0 0.0
    %83 = vmatpush1.msra.mxu0 0.0
    %84 = vmatprep.subr.mxu0 0.0
    %85 = vmatpush1.msra.mxu0 0.0
    %86 = vmatprep.subr.mxu0 0.0
    %87 = vmatpush1.msra.mxu0 0.0
    %88 = vmatprep.subr.mxu0 0.0
    %89 = vmatpush1.msra.mxu0 0.0
    %90 = vmatprep.subr.mxu0 0.0
    %91 = vmatpush1.msra.mxu0 0.0
    %92 = vmatprep.subr.mxu0 0.0
    %93 = vmatpush1.msra.mxu0 0.0
    %94 = vmatprep.subr.mxu0 0.0
    %95 = vmatpush1.msra.mxu0 0.0
    %96 = vmatprep.subr.mxu0 0.0
    %97 = vmatpush1.msra.mxu0 0.0
    %98 = vmatprep.subr.mxu0 0.0
    %99 = vmatpush1.msra.mxu0 0.0
    %100 = vmatprep.subr.mxu0 0.0
    %101 = vmatpush1.msra.mxu0 0.0
    %102 = vmatprep.subr.mxu0 0.0
    %103 = vmatpush1.msra.mxu0 0.0
    %104 = vmatprep.subr.mxu0 0.0
    %105 = vmatpush1.msra.mxu0 0.0
    %106 = vmatprep.subr.mxu0 0.0
    %107 = vmatpush1.msra.mxu0 0.0
    %108 = vmatprep.subr.mxu0 0.0
    %109 = vmatpush1.msra.mxu0 0.0
    %110 = vmatprep.subr.mxu0 0.0
    %111 = vmatpush1.msra.mxu0 0.0
    %112 = vmatprep.subr.mxu0 0.0
    %113 = vmatpush1.msra.mxu0 0.0
    %114 = vmatprep.subr.mxu0 0.0
    %115 = vmatpush1.msra.mxu0 0.0
    %116 = vmatprep.subr.mxu0 0.0
    %117 = vmatpush1.msra.mxu0 0.0
    %118 = vmatprep.mubr.f32.mxu0 0.0
    %119 = vmatmul.mubr.f32.gmra.mrb[0].mxu0 %v48
    %v120 = vpop.f32.mrb[0].mxu0
    %v121 = vadd.f32 %v44, %v120
    %v122 = vpop.f32.mrb[0].mxu0
    %123 = vdwg.mxu0
    %v124 = vld [vmem:[%s3] sm:$0xff]
    %v125 = vld [vmem:[%s3 + $0x8] sm:$0xf]
    %v126 = vld [vmem:[%s4] sm:$0x1]
    %v128 = vlaneseq
    %v129 = vshrl.u32 %v128, 7
    %v130 = vsub.s32 0, %v129
    %v131 = vrot.slane %v126, %v130
    %v134 = vsel %vm50, %v125, 0
    %136 = vmatprep.subr.mxu0 0.0
    %137 = vmatpush1.msra.mxu0 %v124
    %138 = vmatprep.subr.mxu0 0.0
    %139 = vmatpush1.msra.mxu0 %v134
    %140 = vmatprep.subr.mxu0 0.0
    %141 = vmatpush1.msra.mxu0 0.0
    %142 = vmatprep.subr.mxu0 0.0
    %143 = vmatpush1.msra.mxu0 0.0
    %144 = vmatprep.subr.mxu0 0.0
    %145 = vmatpush1.msra.mxu0 0.0
    %146 = vmatprep.subr.mxu0 0.0
    %147 = vmatpush1.msra.mxu0 0.0
    %148 = vmatprep.subr.mxu0 0.0
    %149 = vmatpush1.msra.mxu0 0.0
    %150 = vmatprep.subr.mxu0 0.0
    %151 = vmatpush1.msra.mxu0 0.0
    %152 = vmatprep.subr.mxu0 0.0
    %153 = vmatpush1.msra.mxu0 0.0
    %154 = vmatprep.subr.mxu0 0.0
    %155 = vmatpush1.msra.mxu0 0.0
    %156 = vmatprep.subr.mxu0 0.0
    %157 = vmatpush1.msra.mxu0 0.0
    %158 = vmatprep.subr.mxu0 0.0
    %159 = vmatpush1.msra.mxu0 0.0
    %160 = vmatprep.subr.mxu0 0.0
    %161 = vmatpush1.msra.mxu0 0.0
    %162 = vmatprep.subr.mxu0 0.0
    %163 = vmatpush1.msra.mxu0 0.0
    %164 = vmatprep.subr.mxu0 0.0
    %165 = vmatpush1.msra.mxu0 0.0
    %166 = vmatprep.subr.mxu0 0.0
    %167 = vmatpush1.msra.mxu0 0.0
    %168 = vmatprep.subr.mxu0 0.0
    %169 = vmatpush1.msra.mxu0 0.0
    %170 = vmatprep.subr.mxu0 0.0
    %171 = vmatpush1.msra.mxu0 0.0
    %172 = vmatprep.subr.mxu0 0.0
    %173 = vmatpush1.msra.mxu0 0.0
    %174 = vmatprep.subr.mxu0 0.0
    %175 = vmatpush1.msra.mxu0 0.0
    %176 = vmatprep.subr.mxu0 0.0
    %177 = vmatpush1.msra.mxu0 0.0
    %178 = vmatprep.subr.mxu0 0.0
    %179 = vmatpush1.msra.mxu0 0.0
    %180 = vmatprep.subr.mxu0 0.0
    %181 = vmatpush1.msra.mxu0 0.0
    %182 = vmatprep.subr.mxu0 0.0
    %183 = vmatpush1.msra.mxu0 0.0
    %184 = vmatprep.subr.mxu0 0.0
    %185 = vmatpush1.msra.mxu0 0.0
    %186 = vmatprep.subr.mxu0 0.0
    %187 = vmatpush1.msra.mxu0 0.0
    %188 = vmatprep.subr.mxu0 0.0
    %189 = vmatpush1.msra.mxu0 0.0
    %190 = vmatprep.subr.mxu0 0.0
    %191 = vmatpush1.msra.mxu0 0.0
    %192 = vmatprep.subr.mxu0 0.0
    %193 = vmatpush1.msra.mxu0 0.0
    %194 = vmatprep.subr.mxu0 0.0
    %195 = vmatpush1.msra.mxu0 0.0
    %196 = vmatprep.subr.mxu0 0.0
    %197 = vmatpush1.msra.mxu0 0.0
    %198 = vmatprep.subr.mxu0 0.0
    %199 = vmatpush1.msra.mxu0 0.0
    %200 = vmatprep.mubr.f32.mxu0 0.0
    %201 = vmatmul.mubr.f32.gmra.mrb[0].mxu0 %v48
    %v202 = vpop.f32.mrb[0].mxu0
    %v203 = vadd.f32 %v131, %v202
    %v204 = vpop.f32.mrb[0].mxu0
    %205 = vdwg.mxu0
    %vm206 = vcmp.gt.f32.partialorder %v203, 0.0
    %v207 = vmul.f32 %v203, 0.2
    %v208 = vsel %vm206, %v203, %v207
    %v209 = vld [vmem:[%s5] sm:$0xff]
    %v210 = vld [vmem:[%s5 + $0x8] sm:$0xff]
    %v211 = vld [vmem:[%s5 + $0x10] sm:$0xff]
    %v212 = vld [vmem:[%s5 + $0x18] sm:$0xff]
    %v213 = vld [vmem:[%s6] sm:$0x1]
    %v215 = vlaneseq
    %v216 = vshrl.u32 %v215, 7
    %v217 = vsub.s32 0, %v216
    %v218 = vrot.slane %v213, %v217
    %vm220 = vcmask 261120
    %v222 = vsel %vm220, %v121, 0
    %224 = vmatprep.subr.mxu0 0.0
    %225 = vmatpush1.msra.mxu0 %v209
    %226 = vmatprep.subr.mxu0 0.0
    %227 = vmatpush1.msra.mxu0 %v210
    %228 = vmatprep.subr.mxu0 0.0
    %229 = vmatpush1.msra.mxu0 %v211
    %230 = vmatprep.subr.mxu0 0.0
    %231 = vmatpush1.msra.mxu0 %v212
    %232 = vmatprep.subr.mxu0 0.0
    %233 = vmatpush1.msra.mxu0 0.0
    %234 = vmatprep.subr.mxu0 0.0
    %235 = vmatpush1.msra.mxu0 0.0
    %236 = vmatprep.subr.mxu0 0.0
    %237 = vmatpush1.msra.mxu0 0.0
    %238 = vmatprep.subr.mxu0 0.0
    %239 = vmatpush1.msra.mxu0 0.0
    %240 = vmatprep.subr.mxu0 0.0
    %241 = vmatpush1.msra.mxu0 0.0
    %242 = vmatprep.subr.mxu0 0.0
    %243 = vmatpush1.msra.mxu0 0.0
    %244 = vmatprep.subr.mxu0 0.0
    %245 = vmatpush1.msra.mxu0 0.0
    %246 = vmatprep.subr.mxu0 0.0
    %247 = vmatpush1.msra.mxu0 0.0
    %248 = vmatprep.subr.mxu0 0.0
    %249 = vmatpush1.msra.mxu0 0.0
    %250 = vmatprep.subr.mxu0 0.0
    %251 = vmatpush1.msra.mxu0 0.0
    %252 = vmatprep.subr.mxu0 0.0
    %253 = vmatpush1.msra.mxu0 0.0
    %254 = vmatprep.subr.mxu0 0.0
    %255 = vmatpush1.msra.mxu0 0.0
    %256 = vmatprep.subr.mxu0 0.0
    %257 = vmatpush1.msra.mxu0 0.0
    %258 = vmatprep.subr.mxu0 0.0
    %259 = vmatpush1.msra.mxu0 0.0
    %260 = vmatprep.subr.mxu0 0.0
    %261 = vmatpush1.msra.mxu0 0.0
    %262 = vmatprep.subr.mxu0 0.0
    %263 = vmatpush1.msra.mxu0 0.0
    %264 = vmatprep.subr.mxu0 0.0
    %265 = vmatpush1.msra.mxu0 0.0
    %266 = vmatprep.subr.mxu0 0.0
    %267 = vmatpush1.msra.mxu0 0.0
    %268 = vmatprep.subr.mxu0 0.0
    %269 = vmatpush1.msra.mxu0 0.0
    %270 = vmatprep.subr.mxu0 0.0
    %271 = vmatpush1.msra.mxu0 0.0
    %272 = vmatprep.subr.mxu0 0.0
    %273 = vmatpush1.msra.mxu0 0.0
    %274 = vmatprep.subr.mxu0 0.0
    %275 = vmatpush1.msra.mxu0 0.0
    %276 = vmatprep.subr.mxu0 0.0
    %277 = vmatpush1.msra.mxu0 0.0
    %278 = vmatprep.subr.mxu0 0.0
    %279 = vmatpush1.msra.mxu0 0.0
    %280 = vmatprep.subr.mxu0 0.0
    %281 = vmatpush1.msra.mxu0 0.0
    %282 = vmatprep.subr.mxu0 0.0
    %283 = vmatpush1.msra.mxu0 0.0
    %284 = vmatprep.subr.mxu0 0.0
    %285 = vmatpush1.msra.mxu0 0.0
    %286 = vmatprep.subr.mxu0 0.0
    %287 = vmatpush1.msra.mxu0 0.0
    %288 = vmatprep.mubr.f32.mxu0 0.0
    %289 = vmatmul.mubr.f32.gmra.mrb[0].mxu0 %v222
    %v290 = vpop.f32.mrb[0].mxu0
    %v291 = vadd.f32 %v218, %v290
    %v292 = vpop.f32.mrb[0].mxu0
    %293 = vdwg.mxu0
    %vm294 = vcmp.gt.f32.partialorder %v291, 0.0
    %v295 = vmul.f32 %v291, 0.2
    %v296 = vsel %vm294, %v291, %v295
    %s297 = scalar_lea.vmem %s5, 32
    %v298 = vld [vmem:[%s297] sm:$0xff]
    %v299 = vld [vmem:[%s297 + $0x8] sm:$0xff]
    %v300 = vld [vmem:[%s297 + $0x10] sm:$0xff]
    %v301 = vld [vmem:[%s297 + $0x18] sm:$0xff]
    %s302 = scalar_lea.vmem %s6, 1
    %v303 = vld [vmem:[%s302] sm:$0x1]
    %v305 = vlaneseq
    %v306 = vshrl.u32 %v305, 7
    %v307 = vsub.s32 0, %v306
    %v308 = vrot.slane %v303, %v307
    %v311 = vsel %vm220, %v296, 0
    %313 = vmatprep.subr.mxu0 0.0
    %314 = vmatpush1.msra.mxu0 %v298
    %315 = vmatprep.subr.mxu0 0.0
    %316 = vmatpush1.msra.mxu0 %v299
    %317 = vmatprep.subr.mxu0 0.0
    %318 = vmatpush1.msra.mxu0 %v300
    %319 = vmatprep.subr.mxu0 0.0
    %320 = vmatpush1.msra.mxu0 %v301
    %321 = vmatprep.subr.mxu0 0.0
    %322 = vmatpush1.msra.mxu0 0.0
    %323 = vmatprep.subr.mxu0 0.0
    %324 = vmatpush1.msra.mxu0 0.0
    %325 = vmatprep.subr.mxu0 0.0
    %326 = vmatpush1.msra.mxu0 0.0
    %327 = vmatprep.subr.mxu0 0.0
    %328 = vmatpush1.msra.mxu0 0.0
    %329 = vmatprep.subr.mxu0 0.0
    %330 = vmatpush1.msra.mxu0 0.0
    %331 = vmatprep.subr.mxu0 0.0
    %332 = vmatpush1.msra.mxu0 0.0
    %333 = vmatprep.subr.mxu0 0.0
    %334 = vmatpush1.msra.mxu0 0.0
    %335 = vmatprep.subr.mxu0 0.0
    %336 = vmatpush1.msra.mxu0 0.0
    %337 = vmatprep.subr.mxu0 0.0
    %338 = vmatpush1.msra.mxu0 0.0
    %339 = vmatprep.subr.mxu0 0.0
    %340 = vmatpush1.msra.mxu0 0.0
    %341 = vmatprep.subr.mxu0 0.0
    %342 = vmatpush1.msra.mxu0 0.0
    %343 = vmatprep.subr.mxu0 0.0
    %344 = vmatpush1.msra.mxu0 0.0
    %345 = vmatprep.subr.mxu0 0.0
    %346 = vmatpush1.msra.mxu0 0.0
    %347 = vmatprep.subr.mxu0 0.0
    %348 = vmatpush1.msra.mxu0 0.0
    %349 = vmatprep.subr.mxu0 0.0
    %350 = vmatpush1.msra.mxu0 0.0
    %351 = vmatprep.subr.mxu0 0.0
    %352 = vmatpush1.msra.mxu0 0.0
    %353 = vmatprep.subr.mxu0 0.0
    %354 = vmatpush1.msra.mxu0 0.0
    %355 = vmatprep.subr.mxu0 0.0
    %356 = vmatpush1.msra.mxu0 0.0
    %357 = vmatprep.subr.mxu0 0.0
    %358 = vmatpush1.msra.mxu0 0.0
    %359 = vmatprep.subr.mxu0 0.0
    %360 = vmatpush1.msra.mxu0 0.0
    %361 = vmatprep.subr.mxu0 0.0
    %362 = vmatpush1.msra.mxu0 0.0
    %363 = vmatprep.subr.mxu0 0.0
    %364 = vmatpush1.msra.mxu0 0.0
    %365 = vmatprep.subr.mxu0 0.0
    %366 = vmatpush1.msra.mxu0 0.0
    %367 = vmatprep.subr.mxu0 0.0
    %368 = vmatpush1.msra.mxu0 0.0
    %369 = vmatprep.subr.mxu0 0.0
    %370 = vmatpush1.msra.mxu0 0.0
    %371 = vmatprep.subr.mxu0 0.0
    %372 = vmatpush1.msra.mxu0 0.0
    %373 = vmatprep.subr.mxu0 0.0
    %374 = vmatpush1.msra.mxu0 0.0
    %375 = vmatprep.subr.mxu0 0.0
    %376 = vmatpush1.msra.mxu0 0.0
    %377 = vmatprep.mubr.f32.mxu0 0.0
    %378 = vmatmul.mubr.f32.gmra.mrb[0].mxu0 %v311
    %v379 = vpop.f32.mrb[0].mxu0
    %v380 = vadd.f32 %v308, %v379
    %v381 = vpop.f32.mrb[0].mxu0
    %382 = vdwg.mxu0
    %vm383 = vcmp.gt.f32.partialorder %v380, 0.0
    %v384 = vmul.f32 %v380, 0.2
    %v385 = vsel %vm383, %v380, %v384
    %v386 = vld [vmem:[%s7] sm:$0xff]
    %v387 = vld [vmem:[%s7 + $0x8] sm:$0xff]
    %v388 = vld [vmem:[%s7 + $0x10] sm:$0xff]
    %v389 = vld [vmem:[%s7 + $0x18] sm:$0xff]
    %v390 = vld [vmem:[%s8] sm:$0xff]
    %v391 = vld [vmem:[%s8 + $0x8] sm:$0xff]
    %vm392 = vcmask 130048
    %v394 = vsel %vm392, %v208, 0
    %396 = vmatprep.subr.mxu0 0.0
    %397 = vmatpush1.msra.mxu0 %v390
    %398 = vmatprep.subr.mxu0 0.0
    %399 = vmatpush1.msra.mxu0 %v391
    %400 = vmatprep.subr.mxu0 0.0
    %401 = vmatpush1.msra.mxu0 0.0
    %402 = vmatprep.subr.mxu0 0.0
    %403 = vmatpush1.msra.mxu0 0.0
    %404 = vmatprep.subr.mxu0 0.0
    %405 = vmatpush1.msra.mxu0 0.0
    %406 = vmatprep.subr.mxu0 0.0
    %407 = vmatpush1.msra.mxu0 0.0
    %408 = vmatprep.subr.mxu0 0.0
    %409 = vmatpush1.msra.mxu0 0.0
    %410 = vmatprep.subr.mxu0 0.0
    %411 = vmatpush1.msra.mxu0 0.0
    %412 = vmatprep.subr.mxu0 0.0
    %413 = vmatpush1.msra.mxu0 0.0
    %414 = vmatprep.subr.mxu0 0.0
    %415 = vmatpush1.msra.mxu0 0.0
    %416 = vmatprep.subr.mxu0 0.0
    %417 = vmatpush1.msra.mxu0 0.0
    %418 = vmatprep.subr.mxu0 0.0
    %419 = vmatpush1.msra.mxu0 0.0
    %420 = vmatprep.subr.mxu0 0.0
    %421 = vmatpush1.msra.mxu0 0.0
    %422 = vmatprep.subr.mxu0 0.0
    %423 = vmatpush1.msra.mxu0 0.0
    %424 = vmatprep.subr.mxu0 0.0
    %425 = vmatpush1.msra.mxu0 0.0
    %426 = vmatprep.subr.mxu0 0.0
    %427 = vmatpush1.msra.mxu0 0.0
    %428 = vmatprep.subr.mxu0 0.0
    %429 = vmatpush1.msra.mxu0 0.0
    %430 = vmatprep.subr.mxu0 0.0
    %431 = vmatpush1.msra.mxu0 0.0
    %432 = vmatprep.subr.mxu0 0.0
    %433 = vmatpush1.msra.mxu0 0.0
    %434 = vmatprep.subr.mxu0 0.0
    %435 = vmatpush1.msra.mxu0 0.0
    %436 = vmatprep.subr.mxu0 0.0
    %437 = vmatpush1.msra.mxu0 0.0
    %438 = vmatprep.subr.mxu0 0.0
    %439 = vmatpush1.msra.mxu0 0.0
    %440 = vmatprep.subr.mxu0 0.0
    %441 = vmatpush1.msra.mxu0 0.0
    %442 = vmatprep.subr.mxu0 0.0
    %443 = vmatpush1.msra.mxu0 0.0
    %444 = vmatprep.subr.mxu0 0.0
    %445 = vmatpush1.msra.mxu0 0.0
    %446 = vmatprep.subr.mxu0 0.0
    %447 = vmatpush1.msra.mxu0 0.0
    %448 = vmatprep.subr.mxu0 0.0
    %449 = vmatpush1.msra.mxu0 0.0
    %450 = vmatprep.subr.mxu0 0.0
    %451 = vmatpush1.msra.mxu0 0.0
    %452 = vmatprep.subr.mxu0 0.0
    %453 = vmatpush1.msra.mxu0 0.0
    %454 = vmatprep.subr.mxu0 0.0
    %455 = vmatpush1.msra.mxu0 0.0
    %456 = vmatprep.subr.mxu0 0.0
    %457 = vmatpush1.msra.mxu0 0.0
    %458 = vmatprep.subr.mxu0 0.0
    %459 = vmatpush1.msra.mxu0 0.0
    %460 = vmatprep.mubr.f32.mxu0 0.0
    %461 = vmatmul.mubr.f32.gmra.mrb[0].mxu0 %v394
    %v462 = vpop.f32.mrb[0].mxu0
    %v463 = vadd.f32 0.0, %v462
    %v464 = vpop.f32.mrb[0].mxu0
    %465 = vdwg.mxu0
    %v467 = vsel %vm220, %v385, 0
    %469 = vmatprep.subr.mxu0 0.0
    %470 = vmatpush1.msra.mxu0 %v386
    %471 = vmatprep.subr.mxu0 0.0
    %472 = vmatpush1.msra.mxu0 %v387
    %473 = vmatprep.subr.mxu0 0.0
    %474 = vmatpush1.msra.mxu0 %v388
    %475 = vmatprep.subr.mxu0 0.0
    %476 = vmatpush1.msra.mxu0 %v389
    %477 = vmatprep.subr.mxu0 0.0
    %478 = vmatpush1.msra.mxu0 0.0
    %479 = vmatprep.subr.mxu0 0.0
    %480 = vmatpush1.msra.mxu0 0.0
    %481 = vmatprep.subr.mxu0 0.0
    %482 = vmatpush1.msra.mxu0 0.0
    %483 = vmatprep.subr.mxu0 0.0
    %484 = vmatpush1.msra.mxu0 0.0
    %485 = vmatprep.subr.mxu0 0.0
    %486 = vmatpush1.msra.mxu0 0.0
    %487 = vmatprep.subr.mxu0 0.0
    %488 = vmatpush1.msra.mxu0 0.0
    %489 = vmatprep.subr.mxu0 0.0
    %490 = vmatpush1.msra.mxu0 0.0
    %491 = vmatprep.subr.mxu0 0.0
    %492 = vmatpush1.msra.mxu0 0.0
    %493 = vmatprep.subr.mxu0 0.0
    %494 = vmatpush1.msra.mxu0 0.0
    %495 = vmatprep.subr.mxu0 0.0
    %496 = vmatpush1.msra.mxu0 0.0
    %497 = vmatprep.subr.mxu0 0.0
    %498 = vmatpush1.msra.mxu0 0.0
    %499 = vmatprep.subr.mxu0 0.0
    %500 = vmatpush1.msra.mxu0 0.0
    %501 = vmatprep.subr.mxu0 0.0
    %502 = vmatpush1.msra.mxu0 0.0
    %503 = vmatprep.subr.mxu0 0.0
    %504 = vmatpush1.msra.mxu0 0.0
    %505 = vmatprep.subr.mxu0 0.0
    %506 = vmatpush1.msra.mxu0 0.0
    %507 = vmatprep.subr.mxu0 0.0
    %508 = vmatpush1.msra.mxu0 0.0
    %509 = vmatprep.subr.mxu0 0.0
    %510 = vmatpush1.msra.mxu0 0.0
    %511 = vmatprep.subr.mxu0 0.0
    %512 = vmatpush1.msra.mxu0 0.0
    %513 = vmatprep.subr.mxu0 0.0
    %514 = vmatpush1.msra.mxu0 0.0
    %515 = vmatprep.subr.mxu0 0.0
    %516 = vmatpush1.msra.mxu0 0.0
    %517 = vmatprep.subr.mxu0 0.0
    %518 = vmatpush1.msra.mxu0 0.0
    %519 = vmatprep.subr.mxu0 0.0
    %520 = vmatpush1.msra.mxu0 0.0
    %521 = vmatprep.subr.mxu0 0.0
    %522 = vmatpush1.msra.mxu0 0.0
    %523 = vmatprep.subr.mxu0 0.0
    %524 = vmatpush1.msra.mxu0 0.0
    %525 = vmatprep.subr.mxu0 0.0
    %526 = vmatpush1.msra.mxu0 0.0
    %527 = vmatprep.subr.mxu0 0.0
    %528 = vmatpush1.msra.mxu0 0.0
    %529 = vmatprep.subr.mxu0 0.0
    %530 = vmatpush1.msra.mxu0 0.0
    %531 = vmatprep.subr.mxu0 0.0
    %532 = vmatpush1.msra.mxu0 0.0
    %533 = vmatprep.mubr.f32.mxu0 0.0
    %534 = vmatmul.mubr.f32.gmra.mrb[0].mxu0 %v467
    %v535 = vpop.f32.mrb[0].mxu0
    %v536 = vadd.f32 %v463, %v535
    %v537 = vpop.f32.mrb[0].mxu0
    %538 = vdwg.mxu0
    %v539 = vld [vmem:[%s9] sm:$0x1]
    %v541 = vlaneseq
    %v542 = vshrl.u32 %v541, 7
    %v543 = vsub.s32 0, %v542
    %v544 = vrot.slane %v539, %v543
    %v546 = vadd.f32 %v536, %v544
    %vm547 = vcmask 89088
    %548 = vst.msk [vmem:[#allocation2] sm:$0xff] %vm547, %v546
    // Predicated region
    $region42: #{action_encoder_forward.1} parent=1 // pred_check
      _
    $region43: #{action_encoder_forward.1} parent=1 // pred_check_branch
      %550 = sbr.rel (0) target = $region45
    $region44: #{action_encoder_forward.1} parent=1 // pred_region
      %s552 = ssub.s32 128, 128
      %553 = vsyncadd [#allocation3], %s552
      %s555 = sshll.u32 [#allocation2], 4
      %s556 = int_to_ptr.vmem [resolvable:$true] %s555
      %558 = dma.vmem_to_hbm [thread:$0]  %s556, 128, %s10, [#allocation3]
    $region45: #{action_encoder_forward.1} parent=1 // pred_fallthru
      _
    // Predicated region
    $region46: #{action_encoder_forward.1} parent=1 // pred_check
      _
    $region47: #{action_encoder_forward.1} parent=1 // pred_check_branch
      %560 = sbr.rel (0) target = $region49
    $region48: #{action_encoder_forward.1} parent=1 // pred_region
      %561 = dma.done [#allocation3], 128
    $region49: #{action_encoder_forward.1} parent=1 // pred_fallthru
      _
    %562 = vsyncpa [#allocation3], 1

</llo_original>
